<compile_context>
chip_gen: v7x
topology: tpu7x:2x2x1
jax: 0.10.0
libtpu: 0.0.40
codegen_flags: <defaults>
</compile_context>

<pallas_src>
import functools

import jax
import jax.numpy as jnp
import numpy as np
from jax.experimental import pallas as pl
from jax.experimental.pallas import tpu as pltpu

LANES = 128        # all GEMM output/channel vectors are padded to a multiple of this
NEG_SLOPE = 0.2
BN_EPS = 1e-5

# MXU input dtype (bf16 inputs, fp32 accumulation) and inter-layer activation
# storage dtype.  fp32 inputs would force multi-pass MXU decomposition and 2x
# the DMA bytes on every generation.
MXU_IN_DTYPE = jnp.bfloat16
ACT_DTYPE = jnp.bfloat16
IN_BYTES = np.dtype(MXU_IN_DTYPE).itemsize
ACT_BYTES = np.dtype(ACT_DTYPE).itemsize

MAX_TK = 512                  # K tile (multiple of 128) once K exceeds this
SLAB_BUDGET_BYTES = 12 << 20  # fused-BN VMEM activation-slab budget (v7x-safe)


def _round_up(n, m=LANES):
    return ((n + m - 1) // m) * m


def _pad_last(a, target):
    pad = target - a.shape[-1]
    if pad == 0:
        return a
    return jnp.pad(a, [(0, 0)] * (a.ndim - 1) + [(0, pad)])


def _pick_tm(M, min_tiles=1):
    # Large tiles amortize the ~600-cycle per-grid-step overhead; for
    # "parallel" GEMMs we additionally require >= min_tiles M-tiles so v7x
    # megacore sharding and the software pipeline can actually engage.
    for tm in (1024, 512, 256, 128, 64, 32, 16, 8):
        if M % tm == 0 and M // tm >= min_tiles:
            return tm
    return M


def _k_tiling(K):
    """Returns (padded K, K tile): full-K single block when small, 512-wide
    lane-aligned zero-padded tiles once K gets large (bounds per-step VMEM)."""
    if K <= MAX_TK:
        return K, K
    return _round_up(K, MAX_TK), MAX_TK


def _vmem_limit(tm, tk, npad, extra_bytes=0):
    """Explicit scoped-VMEM budget: double-buffered in/out tiles + fp32
    accumulator + persistent scratch, with headroom; clamped below physical
    VMEM on every generation (v7x has only 64 MiB per TensorCore)."""
    need = (2 * tm * tk * IN_BYTES          # patch tiles (double buffered)
            + 2 * tk * npad * IN_BYTES      # weight tiles (double buffered)
            + 2 * tm * npad * ACT_BYTES     # output tiles (double buffered)
            + tm * npad * 4                 # fp32 accumulator scratch
            + 16 * npad * 4                 # small per-channel vectors
            + extra_bytes)
    need = int(need * 1.5) + (2 << 20)
    return max(8 << 20, min(need, 56 << 20))


# ------------------------------------------------------------------
# Kernel 1: K-tiled GEMM + bias + LeakyReLU (layer 0, no BatchNorm).
# M axis "parallel", K reduction axis innermost / "arbitrary".
# ------------------------------------------------------------------
def _gemm_bias_lrelu_kernel(x_ref, w_ref, b_ref, o_ref, acc_ref):
    k = pl.program_id(1)

    @pl.when(k == 0)
    def _init():
        acc_ref[...] = jnp.zeros_like(acc_ref)

    acc_ref[...] += jnp.dot(x_ref[...], w_ref[...],
                            preferred_element_type=jnp.float32)

    @pl.when(k == pl.num_programs(1) - 1)
    def _epilogue():
        y = acc_ref[...] + b_ref[...]
        o_ref[...] = jnp.where(y >= 0, y, NEG_SLOPE * y).astype(o_ref.dtype)


# ------------------------------------------------------------------
# Kernel 2 (fused path): Conv(GEMM) -> BatchNorm(train) -> LeakyReLU, one call.
# grid = (2, T):
#   pass p==0 : GEMM tile -> bf16 VMEM slab, accumulate per-channel sum/sumsq
#   pass p==1 : (i==0) finalize scale/shift, then affine + LeakyReLU -> output
# Conv bias is dropped (cancels exactly in the BN mean subtraction).  The
# out_specs index_map is (i*p, 0) so pass 0 never writes uninitialized output
# blocks back to HBM.  Stats accumulators are sequential -> both grid axes
# stay "arbitrary"; use the split path for megacore parallelism / big slabs.
# ------------------------------------------------------------------
def _conv_bn_lrelu_fused_kernel(x_ref, w_ref, g_ref, bt_ref, o_ref,
                                y_scr, s_scr, ss_scr, scale_scr, shift_scr,
                                *, count):
    p = pl.program_id(0)
    i = pl.program_id(1)

    @pl.when(jnp.logical_and(p == 0, i == 0))
    def _init():
        s_scr[...] = jnp.zeros_like(s_scr)
        ss_scr[...] = jnp.zeros_like(ss_scr)

    @pl.when(p == 0)
    def _gemm_and_stats():
        y = jnp.dot(x_ref[...], w_ref[...], preferred_element_type=jnp.float32)
        y_scr[i] = y.astype(y_scr.dtype)
        s_scr[...] += jnp.sum(y, axis=0, keepdims=True)
        ss_scr[...] += jnp.sum(y * y, axis=0, keepdims=True)

    @pl.when(jnp.logical_and(p == 1, i == 0))
    def _finalize_stats():
        inv_n = 1.0 / count
        mean = s_scr[...] * inv_n
        # E[y^2] - E[y]^2 on fp32 accumulators; clamped against cancellation.
        # TODO(synk): shifted/Welford accumulation if activation means grow large.
        var = jnp.maximum(ss_scr[...] * inv_n - mean * mean, 0.0)
        scale = g_ref[...] * jax.lax.rsqrt(var + BN_EPS)
        scale_scr[...] = scale
        shift_scr[...] = bt_ref[...] - mean * scale

    @pl.when(p == 1)
    def _affine_lrelu():
        y = y_scr[i].astype(jnp.float32) * scale_scr[...] + shift_scr[...]
        o_ref[...] = jnp.where(y >= 0, y, NEG_SLOPE * y).astype(o_ref.dtype)


# ------------------------------------------------------------------
# Kernels 3+4 (split path — used when the slab would not fit VMEM or K needs
# tiling; also the v7x megacore-friendly formulation since both M grids are
# "parallel"):
#   Kernel 3: K-tiled GEMM -> bf16 y + per-tile (sum, sumsq) partials.
#   (tiny per-channel reduction + scale/shift math in plain-JAX glue)
#   Kernel 4: y * scale + shift -> LeakyReLU.
# ------------------------------------------------------------------
def _gemm_stats_kernel(x_ref, w_ref, y_ref, stats_ref, acc_ref):
    k = pl.program_id(1)

    @pl.when(k == 0)
    def _init():
        acc_ref[...] = jnp.zeros_like(acc_ref)

    acc_ref[...] += jnp.dot(x_ref[...], w_ref[...],
                            preferred_element_type=jnp.float32)

    @pl.when(k == pl.num_programs(1) - 1)
    def _epilogue():
        y = acc_ref[...]
        y_ref[...] = y.astype(y_ref.dtype)
        sums = jnp.concatenate(
            [jnp.sum(y, axis=0, keepdims=True),
             jnp.sum(y * y, axis=0, keepdims=True)], axis=0)   # (2, Np)
        stats_ref[...] = sums.reshape(stats_ref.shape)


def _scale_shift_lrelu_kernel(y_ref, sc_ref, sh_ref, o_ref):
    y = y_ref[...].astype(jnp.float32) * sc_ref[...] + sh_ref[...]
    o_ref[...] = jnp.where(y >= 0, y, NEG_SLOPE * y).astype(o_ref.dtype)


# ------------------------------------------------------------------
# Kernel 5: fused head — 1x1 conv -> LeakyReLU -> 1x1 conv on pooled (B, C).
# ------------------------------------------------------------------
def _head_kernel(x_ref, w1_ref, b1_ref, w2_ref, b2_ref, o_ref):
    h = jnp.dot(x_ref[...], w1_ref[...],
                preferred_element_type=jnp.float32) + b1_ref[...]
    h = jnp.where(h >= 0, h, NEG_SLOPE * h)
    o_ref[...] = jnp.dot(h.astype(w2_ref.dtype), w2_ref[...],
                         preferred_element_type=jnp.float32) + b2_ref[...]


# ------------------------------------------------------------------
# JAX glue: im2col patch extraction (kernel=3, pad=1) for the conv GEMMs.
# TODO(synk): fold the 9 taps into the conv kernel as a reduction axis over
# shifted NHWC windows instead of materializing the 9x patch slab in HBM.
# ------------------------------------------------------------------
def im2col(x_nhwc, stride):
    B, H, W, C = x_nhwc.shape
    k, pad = 3, 1
    Ho = (H + 2 * pad - k) // stride + 1
    Wo = (W + 2 * pad - k) // stride + 1
    xp = jnp.pad(x_nhwc, ((0, 0), (pad, pad), (pad, pad), (0, 0)))
    cols = []
    for dh in range(k):
        for dw in range(k):
            cols.append(xp[:, dh:dh + stride * Ho:stride,
                            dw:dw + stride * Wo:stride, :])
    patches = jnp.concatenate(cols, axis=-1)            # (B, Ho, Wo, 9*C)
    return patches.reshape(B * Ho * Wo, k * k * C), Ho, Wo


def _conv_weight_mat(w_oihw, n_pad, k_pad):
    # patch column order is (kh, kw, cin) -> permute OIHW weight accordingly,
    # zero-pad output channels to the lane-dense width and K rows to k_pad.
    Cout, Cin, kh, kw = w_oihw.shape
    w_mat = jnp.transpose(w_oihw, (2, 3, 1, 0)).reshape(kh * kw * Cin, Cout)
    w_mat = _pad_last(w_mat, n_pad)
    if k_pad != w_mat.shape[0]:
        w_mat = jnp.pad(w_mat, ((0, k_pad - w_mat.shape[0]), (0, 0)))
    return w_mat


# ------------------------------------------------------------------
# Layer wrappers
# ------------------------------------------------------------------
def conv3x3_lrelu(x_nhwc, w_oihw, b, stride):
    """Conv(3x3, pad=1) + bias + LeakyReLU as one K-tiled lane-dense GEMM kernel."""
    B = x_nhwc.shape[0]
    Cout = w_oihw.shape[0]
    patches, Ho, Wo = im2col(x_nhwc, stride)
    M, K = patches.shape
    Np = _round_up(Cout)
    Kp, tk = _k_tiling(K)
    if Kp != K:
        patches = jnp.pad(patches, ((0, 0), (0, Kp - K)))
    w_mat = _conv_weight_mat(w_oihw, Np, Kp)
    b_p = _pad_last(b.reshape(1, Cout), Np).astype(jnp.float32)
    tm = _pick_tm(M, min_tiles=4 if M >= 512 else 1)
    T, Kt = M // tm, Kp // tk
    y = pl.pallas_call(
        _gemm_bias_lrelu_kernel,
        out_shape=jax.ShapeDtypeStruct((M, Np), ACT_DTYPE),
        grid=(T, Kt),
        in_specs=[pl.BlockSpec((tm, tk), lambda i, k: (i, k)),
                  pl.BlockSpec((tk, Np), lambda i, k: (k, 0)),
                  pl.BlockSpec((1, Np), lambda i, k: (0, 0))],
        out_specs=pl.BlockSpec((tm, Np), lambda i, k: (i, 0)),
        scratch_shapes=[pltpu.VMEM((tm, Np), jnp.float32)],
        compiler_params=pltpu.CompilerParams(
            dimension_semantics=("parallel", "arbitrary"),
            vmem_limit_bytes=_vmem_limit(tm, tk, Np)),
    )(patches.astype(MXU_IN_DTYPE), w_mat.astype(MXU_IN_DTYPE), b_p)
    return y[:, :Cout].reshape(B, Ho, Wo, Cout)


def _conv_bn_fused_call(patches, w_oihw, gamma, beta, M, K, Np):
    Cout = w_oihw.shape[0]
    w_mat = _conv_weight_mat(w_oihw, Np, K)
    g_p = _pad_last(gamma.reshape(1, Cout), Np).astype(jnp.float32)
    bt_p = _pad_last(beta.reshape(1, Cout), Np).astype(jnp.float32)
    tm = _pick_tm(M)
    T = M // tm
    slab_bytes = T * tm * Np * ACT_BYTES
    return pl.pallas_call(
        functools.partial(_conv_bn_lrelu_fused_kernel, count=float(M)),
        out_shape=jax.ShapeDtypeStruct((M, Np), ACT_DTYPE),
        grid=(2, T),
        in_specs=[
            # Patches are only consumed in pass 0; route pass 1 back to block 0
            # so the pipeline does not re-stream them from HBM.
            pl.BlockSpec((tm, K), lambda p, i: (i * (1 - p), 0)),
            pl.BlockSpec((K, Np), lambda p, i: (0, 0)),
            pl.BlockSpec((1, Np), lambda p, i: (0, 0)),
            pl.BlockSpec((1, Np), lambda p, i: (0, 0)),
        ],
        # Pass 0 aliases one output block (never written there) -> only pass 1
        # ever writes output blocks back to HBM (halves output write traffic).
        out_specs=pl.BlockSpec((tm, Np), lambda p, i: (i * p, 0)),
        scratch_shapes=[
            pltpu.VMEM((T, tm, Np), ACT_DTYPE),     # bf16 activation slab
            pltpu.VMEM((1, Np), jnp.float32),       # per-channel sum
            pltpu.VMEM((1, Np), jnp.float32),       # per-channel sum of squares
            pltpu.VMEM((1, Np), jnp.float32),       # BN scale
            pltpu.VMEM((1, Np), jnp.float32),       # BN shift
        ],
        compiler_params=pltpu.CompilerParams(
            dimension_semantics=("arbitrary", "arbitrary"),
            vmem_limit_bytes=_vmem_limit(tm, K, Np, extra_bytes=slab_bytes)),
    )(patches.astype(MXU_IN_DTYPE), w_mat.astype(MXU_IN_DTYPE), g_p, bt_p)


def _conv_bn_split_call(patches, w_oihw, gamma, beta, M, K, Np):
    Cout = w_oihw.shape[0]
    Kp, tk = _k_tiling(K)
    if Kp != K:
        patches = jnp.pad(patches, ((0, 0), (0, Kp - K)))
    w_mat = _conv_weight_mat(w_oihw, Np, Kp)
    tm = _pick_tm(M, min_tiles=4 if M >= 512 else 1)
    T, Kt = M // tm, Kp // tk

    y, stats = pl.pallas_call(
        _gemm_stats_kernel,
        out_shape=(jax.ShapeDtypeStruct((M, Np), ACT_DTYPE),
                   jax.ShapeDtypeStruct((T, 2, Np), jnp.float32)),
        grid=(T, Kt),
        in_specs=[pl.BlockSpec((tm, tk), lambda i, k: (i, k)),
                  pl.BlockSpec((tk, Np), lambda i, k: (k, 0))],
        out_specs=(pl.BlockSpec((tm, Np), lambda i, k: (i, 0)),
                   pl.BlockSpec((1, 2, Np), lambda i, k: (i, 0, 0))),
        scratch_shapes=[pltpu.VMEM((tm, Np), jnp.float32)],
        compiler_params=pltpu.CompilerParams(
            dimension_semantics=("parallel", "arbitrary"),
            vmem_limit_bytes=_vmem_limit(tm, tk, Np)),
    )(patches.astype(MXU_IN_DTYPE), w_mat.astype(MXU_IN_DTYPE))

    # Tiny O(Np) cross-tile reduction + BN scale/shift in plain JAX.
    totals = jnp.sum(stats, axis=0)                            # (2, Np)
    mean = totals[0] / M
    var = jnp.maximum(totals[1] / M - mean * mean, 0.0)
    g_p = _pad_last(gamma.reshape(1, Cout), Np).astype(jnp.float32)
    bt_p = _pad_last(beta.reshape(1, Cout), Np).astype(jnp.float32)
    scale = g_p * jax.lax.rsqrt(var.reshape(1, Np) + BN_EPS)
    shift = bt_p - mean.reshape(1, Np) * scale

    return pl.pallas_call(
        _scale_shift_lrelu_kernel,
        out_shape=jax.ShapeDtypeStruct((M, Np), ACT_DTYPE),
        grid=(T,),
        in_specs=[pl.BlockSpec((tm, Np), lambda i: (i, 0)),
                  pl.BlockSpec((1, Np), lambda i: (0, 0)),
                  pl.BlockSpec((1, Np), lambda i: (0, 0))],
        out_specs=pl.BlockSpec((tm, Np), lambda i: (i, 0)),
        compiler_params=pltpu.CompilerParams(
            dimension_semantics=("parallel",),
            vmem_limit_bytes=_vmem_limit(tm, Np, Np)),
    )(y, scale, shift)


def conv3x3_bn_lrelu(x_nhwc, w_oihw, gamma, beta, stride, *, force_split=False):
    """Conv(3x3, pad=1) + BatchNorm(train) + LeakyReLU.

    The conv bias is mathematically a no-op before training-mode BatchNorm
    (cancels in the mean subtraction), so it is dropped entirely.
    """
    B = x_nhwc.shape[0]
    Cout = w_oihw.shape[0]
    patches, Ho, Wo = im2col(x_nhwc, stride)
    M, K = patches.shape
    Np = _round_up(Cout)
    slab_bytes = M * Np * ACT_BYTES
    use_fused = ((not force_split) and K <= MAX_TK
                 and slab_bytes <= SLAB_BUDGET_BYTES)
    if use_fused:
        y = _conv_bn_fused_call(patches, w_oihw, gamma, beta, M, K, Np)
    else:
        y = _conv_bn_split_call(patches, w_oihw, gamma, beta, M, K, Np)
    return y[:, :Cout].reshape(B, Ho, Wo, Cout)


def head_fc(pooled, w1, b1, w2, b2):
    """1x1 conv -> LeakyReLU -> 1x1 conv on the pooled (B, C), one kernel call."""
    B, C = pooled.shape
    C1 = w1.shape[0]                       # 2 * cur_channels
    N1p = _round_up(C1)
    w1_mat = _pad_last(w1.reshape(C1, C).T, N1p)                   # (C, N1p)
    b1_p = _pad_last(b1.reshape(1, C1), N1p).astype(jnp.float32)
    w2_mat = jnp.pad(w2.reshape(1, C1).T,
                     ((0, N1p - C1), (0, LANES - 1)))              # (N1p, 128)
    b2_p = _pad_last(b2.reshape(1, 1), LANES).astype(jnp.float32)
    out = pl.pallas_call(
        _head_kernel,
        out_shape=jax.ShapeDtypeStruct((B, LANES), jnp.float32),
        grid=(1,),
        in_specs=[pl.BlockSpec((B, C), lambda i: (0, 0)),
                  pl.BlockSpec((C, N1p), lambda i: (0, 0)),
                  pl.BlockSpec((1, N1p), lambda i: (0, 0)),
                  pl.BlockSpec((N1p, LANES), lambda i: (0, 0)),
                  pl.BlockSpec((1, LANES), lambda i: (0, 0))],
        out_specs=pl.BlockSpec((B, LANES), lambda i: (0, 0)),
        compiler_params=pltpu.CompilerParams(
            dimension_semantics=("arbitrary",)),
    )(pooled.astype(MXU_IN_DTYPE), w1_mat.astype(MXU_IN_DTYPE), b1_p,
      w2_mat.astype(MXU_IN_DTYPE), b2_p)
    return out[:, :1]


# ------------------------------------------------------------------
# Full forward pass (mirrors nn.Sequential in Discriminator.__init__)
# ------------------------------------------------------------------
def discriminator_forward(params, x_nchw, *, bn_path="auto"):
    # TODO(synk): at these toy sizes per-pallas_call launch overhead dominates;
    # the whole network fits in VMEM and could be one fused pallas_call.
    x = jnp.transpose(x_nchw, (0, 2, 3, 1)).astype(jnp.float32)   # NCHW -> NHWC

    for layer in params["conv_layers"]:
        if layer["bn"] is None:
            x = conv3x3_lrelu(x, layer["w"], layer["b"], layer["stride"])
        else:
            gamma, beta = layer["bn"]
            # layer["b"] is intentionally unused (cancels inside BatchNorm).
            x = conv3x3_bn_lrelu(x, layer["w"], gamma, beta, layer["stride"],
                                 force_split=(bn_path == "split"))

    # AdaptiveAvgPool2d(1): tiny (B, H, W, C) reduction, plain-JAX glue
    pooled = jnp.mean(x.astype(jnp.float32), axis=(1, 2))         # (B, C)

    # Conv2d(cur, 2*cur, 1) -> LeakyReLU -> Conv2d(2*cur, 1, 1) -> Flatten
    w1, b1 = params["fc1"]
    w2, b2 = params["fc2"]
    return head_fc(pooled, w1, b1, w2, b2)                        # (B, 1)


# ------------------------------------------------------------------
# Deterministic parameter init (shapes follow Discriminator.__init__)
# ------------------------------------------------------------------
def init_params(key, base_channels=8, n_blocks=2):
    keys = iter(jax.random.split(key, 8 + 8 * n_blocks))

    def conv_p(cin, cout, ksz):
        k1, k2 = jax.random.split(next(keys))
        w = jax.random.normal(k1, (cout, cin, ksz, ksz), jnp.float32) \
            / np.sqrt(cin * ksz * ksz)
        b = 0.1 * jax.random.normal(k2, (cout,), jnp.float32)
        return w, b

    def bn_p(c):
        k1, k2 = jax.random.split(next(keys))
        return (1.0 + 0.1 * jax.random.normal(k1, (c,), jnp.float32),
                0.1 * jax.random.normal(k2, (c,), jnp.float32))

    layers = []
    C = base_channels
    w, b = conv_p(3, C, 3)
    layers.append(dict(w=w, b=b, stride=1, bn=None))
    w, b = conv_p(C, C, 3)
    layers.append(dict(w=w, b=b, stride=2, bn=bn_p(C)))
    cur = C
    for _ in range(n_blocks):
        w, b = conv_p(cur, 2 * cur, 3)
        layers.append(dict(w=w, b=b, stride=1, bn=bn_p(2 * cur)))
        w, b = conv_p(2 * cur, 2 * cur, 3)
        layers.append(dict(w=w, b=b, stride=2, bn=bn_p(2 * cur)))
        cur *= 2
    fc1 = conv_p(cur, 2 * cur, 1)
    fc2 = conv_p(2 * cur, 1, 1)
    return {"conv_layers": layers, "fc1": fc1, "fc2": fc2}


# ------------------------------------------------------------------
# Pure-JAX fp32 reference (same math as the PyTorch module) for validation
# ------------------------------------------------------------------
def _conv_ref(x, w, b, stride, pad):
    y = jax.lax.conv_general_dilated(
        x, w, window_strides=(stride, stride),
        padding=((pad, pad), (pad, pad)),
        dimension_numbers=("NCHW", "OIHW", "NCHW"),
        precision=jax.lax.Precision.HIGHEST)
    return y + b.reshape(1, -1, 1, 1)


def _lrelu_ref(x):
    return jnp.where(x >= 0, x, 0.2 * x)


def discriminator_ref(params, x_nchw):
    x = x_nchw.astype(jnp.float32)
    for layer in params["conv_layers"]:
        x = _conv_ref(x, layer["w"], layer["b"], layer["stride"], 1)
        if layer["bn"] is not None:
            g, bt = layer["bn"]
            mean = jnp.mean(x, axis=(0, 2, 3), keepdims=True)
            var = jnp.mean((x - mean) ** 2, axis=(0, 2, 3), keepdims=True)
            x = (x - mean) / jnp.sqrt(var + 1e-5)
            x = x * g.reshape(1, -1, 1, 1) + bt.reshape(1, -1, 1, 1)
        x = _lrelu_ref(x)
    x = jnp.mean(x, axis=(2, 3), keepdims=True)
    w1, b1 = params["fc1"]
    x = _lrelu_ref(_conv_ref(x, w1, b1, 1, 0))
    w2, b2 = params["fc2"]
    x = _conv_ref(x, w2, b2, 1, 0)
    return x.reshape(x.shape[0], -1)


if __name__ == "__main__":
    key = jax.random.PRNGKey(0)
    pkey, xkey = jax.random.split(key)
    params = init_params(pkey, base_channels=8, n_blocks=2)
    x = jax.random.normal(xkey, (2, 3, 16, 16), jnp.float32)  # NCHW like PyTorch

    # Default path (fused VMEM-slab BN kernels) and the explicit split
    # (megacore-parallel partial-stats) path — both must match the reference.
    out_fused = jax.block_until_ready(discriminator_forward(params, x))
    out_split = jax.block_until_ready(
        discriminator_forward(params, x, bn_path="split"))

    ref = discriminator_ref(params, x)
    assert out_fused.shape == (2, 1), out_fused.shape
    assert out_split.shape == (2, 1), out_split.shape

    scale = max(1.0, float(jnp.max(jnp.abs(ref))))
    # Tolerance sized for bf16 MXU inputs / bf16 inter-layer activations
    # (fp32 accumulation) across 6 conv layers + head.
    tol = 4e-2 * scale
    err_fused = float(jnp.max(jnp.abs(out_fused - ref)))
    err_split = float(jnp.max(jnp.abs(out_split - ref)))
    err_cross = float(jnp.max(jnp.abs(out_fused - out_split)))
    assert err_fused <= tol, f"fused path mismatch vs reference: {err_fused} > {tol}"
    assert err_split <= tol, f"split path mismatch vs reference: {err_split} > {tol}"
    assert err_cross <= 1e-2 * scale, f"fused vs split mismatch: {err_cross}"
    print("KERNEL_OK")
</pallas_src>

<mosaic_0001>
module attributes {stable_mosaic.version = 11 : i64} {
  func.func @_gemm_bias_lrelu_kernel(%arg0: i32, %arg1: i32, %arg2: memref<128x27xbf16, #tpu.memory_space<vmem>>, %arg3: memref<27x128xbf16, #tpu.memory_space<vmem>>, %arg4: memref<1x128xf32, #tpu.memory_space<vmem>>, %arg5: memref<128x128xbf16, #tpu.memory_space<vmem>>, %arg6: memref<128x128xf32, #tpu.memory_space<vmem>>) attributes {dimension_semantics = [#tpu.dimension_semantics<parallel>, #tpu.dimension_semantics<arbitrary>], iteration_bounds = array<i64: 4, 1>, scalar_prefetch = 0 : i64, scratch_operands = 1 : i64, tpu.core_type = #tpu.core_type<tc>, window_params = [{transform_indices = @transform_0, window_bounds = array<i64: 128, 27>}, {transform_indices = @transform_1, window_bounds = array<i64: 27, 128>}, {pipeline_mode = #tpu.pipeline_mode<synchronous>, transform_indices = @transform_2, window_bounds = array<i64: 1, 128>}, {transform_indices = @transform_3, window_bounds = array<i64: 128, 128>}]} {
    %c0_i32 = arith.constant 0 : i32
    %0 = arith.cmpi eq, %arg1, %c0_i32 : i32
    %1 = arith.extui %0 : i1 to i32
    %c0_i32_0 = arith.constant 0 : i32
    %2 = arith.cmpi ne, %1, %c0_i32_0 : i32
    scf.if %2 {
      %cst_10 = arith.constant 0.000000e+00 : f32
      %12 = vector.broadcast %cst_10 : f32 to vector<128x128xf32>
      %c0_11 = arith.constant 0 : index
      %c0_12 = arith.constant 0 : index
      %13 = vector.load %arg6[%c0_11, %c0_12] : memref<128x128xf32, #tpu.memory_space<vmem>>, vector<128x128xf32>
      tpu.vector_store %arg6[%c0_11, %c0_12], %12 {strides = array<i32>} : memref<128x128xf32, #tpu.memory_space<vmem>>, vector<128x128xf32>,
    } else {
    }
    %c0 = arith.constant 0 : index
    %c0_1 = arith.constant 0 : index
    %3 = vector.load %arg6[%c0, %c0_1] : memref<128x128xf32, #tpu.memory_space<vmem>>, vector<128x128xf32>
    %c0_2 = arith.constant 0 : index
    %c0_3 = arith.constant 0 : index
    %4 = vector.load %arg2[%c0_2, %c0_3] : memref<128x27xbf16, #tpu.memory_space<vmem>>, vector<128x27xbf16>
    %c0_4 = arith.constant 0 : index
    %c0_5 = arith.constant 0 : index
    %5 = vector.load %arg3[%c0_4, %c0_5] : memref<27x128xbf16, #tpu.memory_space<vmem>>, vector<27x128xbf16>
    %cst = arith.constant dense<0.000000e+00> : vector<128x128xf32>
    %6 = tpu.matmul %4, %5, %cst {dimension_numbers = #tpu.dot_dimension_numbers<[1], [0], [0], [1], [0, 0, 1, 1], [], []>} : vector<128x27xbf16>, vector<27x128xbf16>, vector<128x128xf32> -> vector<128x128xf32>
    %7 = arith.addf %3, %6 : vector<128x128xf32>
    %c0_6 = arith.constant 0 : index
    %c0_7 = arith.constant 0 : index
    %8 = vector.load %arg6[%c0_6, %c0_7] : memref<128x128xf32, #tpu.memory_space<vmem>>, vector<128x128xf32>
    tpu.vector_store %arg6[%c0_6, %c0_7], %7 {strides = array<i32>} : memref<128x128xf32, #tpu.memory_space<vmem>>, vector<128x128xf32>,
    %c0_i32_8 = arith.constant 0 : i32
    %9 = arith.cmpi eq, %arg1, %c0_i32_8 : i32
    %10 = arith.extui %9 : i1 to i32
    %c0_i32_9 = arith.constant 0 : i32
    %11 = arith.cmpi ne, %10, %c0_i32_9 : i32
    scf.if %11 {
      %c0_10 = arith.constant 0 : index
      %c0_11 = arith.constant 0 : index
      %12 = vector.load %arg6[%c0_10, %c0_11] : memref<128x128xf32, #tpu.memory_space<vmem>>, vector<128x128xf32>
      %c0_12 = arith.constant 0 : index
      %c0_13 = arith.constant 0 : index
      %13 = vector.load %arg4[%c0_12, %c0_13] : memref<1x128xf32, #tpu.memory_space<vmem>>, vector<1x128xf32>
      %14 = vector.broadcast %13 : vector<1x128xf32> to vector<128x128xf32>
      %15 = arith.addf %12, %14 : vector<128x128xf32>
      %cst_14 = arith.constant 0.000000e+00 : f32
      %16 = vector.broadcast %cst_14 : f32 to vector<128x128xf32>
      %17 = arith.cmpf oge, %15, %16 : vector<128x128xf32>
      %cst_15 = arith.constant 2.000000e-01 : f32
      %18 = vector.broadcast %cst_15 : f32 to vector<128x128xf32>
      %19 = arith.mulf %18, %15 : vector<128x128xf32>
      %20 = arith.select %17, %15, %19 : vector<128x128xi1>, vector<128x128xf32>
      %21 = arith.truncf %20 : vector<128x128xf32> to vector<128x128xbf16>
      %c0_16 = arith.constant 0 : index
      %c0_17 = arith.constant 0 : index
      %22 = vector.load %arg5[%c0_16, %c0_17] : memref<128x128xbf16, #tpu.memory_space<vmem>>, vector<128x128xbf16>
      tpu.vector_store %arg5[%c0_16, %c0_17], %21 {strides = array<i32>} : memref<128x128xbf16, #tpu.memory_space<vmem>>, vector<128x128xbf16>,
    } else {
    }
    return
  }
  func.func @transform_0(%arg0: i32, %arg1: i32) -> (i32, i32) {
    %c0_i32 = arith.constant 0 : i32
    return %arg0, %arg1 : i32, i32
  }
  func.func @transform_1(%arg0: i32, %arg1: i32) -> (i32, i32) {
    %c0_i32 = arith.constant 0 : i32
    %c0_i32_0 = arith.constant 0 : i32
    return %arg1, %c0_i32 : i32, i32
  }
  func.func @transform_2(%arg0: i32, %arg1: i32) -> (i32, i32) {
    %c0_i32 = arith.constant 0 : i32
    %c0_i32_0 = arith.constant 0 : i32
    %c0_i32_1 = arith.constant 0 : i32
    return %c0_i32, %c0_i32_0 : i32, i32
  }
  func.func @transform_3(%arg0: i32, %arg1: i32) -> (i32, i32) {
    %c0_i32 = arith.constant 0 : i32
    %c0_i32_0 = arith.constant 0 : i32
    return %arg0, %c0_i32 : i32, i32
  }
}

</mosaic_0001>

<llo_original>
// kernel: tpu_custom_call.1
$region0: #{tpu_custom_call.1}
  #allocation0 [shape = 'u32[]', space=smem, size = 0x4, offset = 0x4, fixed_abs, tag = 'smem constant byte address 0x4 - core index']
  #allocation1 [shape = 'u32[144,128]{1,0:T(1,128)}', space=vmem, size = 0x12000, scoped, tag = 'internal scratch']
  #allocation2 [shape = 'f32[128,128]{1,0:T(8,128)}', space=vmem, size = 0x10000, scoped, tag = 'scratch operand']
  %s0 = inlined_call_operand.vmem [shape: bf16[512,27], index: 0, kind: input, shape index: {}]
  %s1 = inlined_call_operand.vmem [shape: bf16[27,128], index: 1, kind: input, shape index: {}]
  %s2 = inlined_call_operand.vmem [shape: f32[1,128], index: 2, kind: input, shape index: {}]
  %s3 = inlined_call_operand.hbm [shape: bf16[512,128], index: 3, kind: output, shape index: {}]
  %s4 = sld [smem:[#allocation0]]
  $region53: #{tpu_custom_call.1} parent=0
    _
  %s6 = ssub.s32 1, %s4
  %s7 = scalar_select 0, %s6, %s4
  $region1: #{tpu_custom_call.1} parent=0
    #allocation3 [shape = 'u8[65536]{0}', space=vmem, size = 0x10000, scoped, tag = 'output window, operand 0']
    #allocation4 [shape = 's32[2]{0}', space=sflag, size = 0x8, scoped, tag = 'scoped memory for tpu_custom_call.1']
    %8 = vsyncpa [#allocation4], 0
    %s9 = scalar_lea.sflag [#allocation4], 1
    %10 = vsyncpa %s9, 0
    loop: start=0, step=1, limit=6
    $region2: #{tpu_custom_call.1} parent=1 // loop_pre_header
      _
    $region3: #{tpu_custom_call.1} parent=1 // loop_header
      %s12 = sphi 0, %s16
      %p13 = scmp.ge.s32.totalorder %s12, 6
      %s19 = sphi 0, %s31
      %s20 = sphi 0, %s27
      %s21 = sphi 0, %s19
      %s22 = sphi 0, %s20
      %s23 = sphi 0, %s21
      %s24 = sphi 0, %s22
      %s36 = sphi 0, %s38
      %s39 = sphi 0, %s36
      %s40 = sphi 0, %s39
      %s56 = sphi 0, %s40
      %s62 = sphi 0, %s64
      %s65 = sphi 0, %s62
      %s66 = sphi 0, %s65
      %s82 = sphi 0, %s66
      %s86 = sphi 0, %s86
      %s88 = sphi 0, %s86
      %s89 = sphi 0, %s88
      %s103 = sphi 0, %s89
      %s109 = sphi 0, %s111
      %s112 = sphi 0, %s109
      %s113 = sphi 0, %s112
      %s129 = sphi 0, %s113
    $region4: #{tpu_custom_call.1} parent=1 // loop_header_branch
      %15 = sbr.rel (%p13) target = $region8
    $region5: #{tpu_custom_call.1} parent=1 // loop_body
      %s17 = ssub.s32 %s12, 1
      %s18 = ssub.s32 %s12, 2
      %s25 = sadd.s32 1, %s20
      %p26 = scmp.ge.s32.totalorder %s25, 1
      %s27 = scalar_select %p26, 0, %s25
      %s28 = sadd.s32 1, %s19
      %s29 = scalar_select %p26, %s28, %s19
      %p30 = scmp.ge.s32.totalorder %s29, 4
      %s31 = scalar_select %p30, 0, %s29
      %s32 = ssub.s32 %s19, %s31
      %s33 = ssub.s32 %s20, %s27
      %s34 = sor.u32 %s32, %s33
      %p35 = scmp.eq.s32.totalorder %s34, 0
      %s37 = sadd.s32 %s36, 1
      %s38 = scalar_select %p35, %s36, %s37
      %p41 = pneg %p35
      %p42 = scmp.eq.s32.totalorder %s12, 3
      %p43 = por %p41, %p42
      %p44 = scmp.ne.s32.totalorder %s36, %s39
      %p45 = scmp.eq.s32.totalorder %s12, 0
      %p46 = por %p44, %p45
      %p47 = scmp.ne.s32.totalorder %s36, %s39
      %p48 = scmp.eq.s32.totalorder %s17, 3
      %p49 = por %p47, %p48
      %p50 = scmp.ne.s32.totalorder %s39, %s40
      %p51 = scmp.eq.s32.totalorder %s17, 0
      %p52 = por %p50, %p51
      %p53 = scmp.ne.s32.totalorder %s39, %s40
      %p54 = scmp.eq.s32.totalorder %s18, 3
      %p55 = por %p53, %p54
      %p57 = scmp.ne.s32.totalorder %s40, %s56
      %p58 = scmp.eq.s32.totalorder %s18, 0
      %p59 = por %p57, %p58
      %s60 = ssub.s32 %s20, %s27
      %p61 = scmp.eq.s32.totalorder %s60, 0
      %s63 = sadd.s32 %s62, 1
      %s64 = scalar_select %p61, %s62, %s63
      %p67 = pneg %p61
      %p68 = scmp.eq.s32.totalorder %s12, 3
      %p69 = por %p67, %p68
      %p70 = scmp.ne.s32.totalorder %s62, %s65
      %p71 = scmp.eq.s32.totalorder %s12, 0
      %p72 = por %p70, %p71
      %p73 = scmp.ne.s32.totalorder %s62, %s65
      %p74 = scmp.eq.s32.totalorder %s17, 3
      %p75 = por %p73, %p74
      %p76 = scmp.ne.s32.totalorder %s65, %s66
      %p77 = scmp.eq.s32.totalorder %s17, 0
      %p78 = por %p76, %p77
      %p79 = scmp.ne.s32.totalorder %s65, %s66
      %p80 = scmp.eq.s32.totalorder %s18, 3
      %p81 = por %p79, %p80
      %p83 = scmp.ne.s32.totalorder %s66, %s82
      %p84 = scmp.eq.s32.totalorder %s18, 0
      %p85 = por %p83, %p84
      %s87 = sadd.s32 %s86, 1
      %p90 = scmp.eq.s32.totalorder %s12, 3
      %p91 = scmp.ne.s32.totalorder %s86, %s88
      %p92 = scmp.eq.s32.totalorder %s12, 0
      %p93 = por %p91, %p92
      %p94 = scmp.ne.s32.totalorder %s86, %s88
      %p95 = scmp.eq.s32.totalorder %s17, 3
      %p96 = por %p94, %p95
      %p97 = scmp.ne.s32.totalorder %s88, %s89
      %p98 = scmp.eq.s32.totalorder %s17, 0
      %p99 = por %p97, %p98
      %p100 = scmp.ne.s32.totalorder %s88, %s89
      %p101 = scmp.eq.s32.totalorder %s18, 3
      %p102 = por %p100, %p101
      %p104 = scmp.ne.s32.totalorder %s89, %s103
      %p105 = scmp.eq.s32.totalorder %s18, 0
      %p106 = por %p104, %p105
      %s107 = ssub.s32 %s19, %s31
      %p108 = scmp.eq.s32.totalorder %s107, 0
      %s110 = sadd.s32 %s109, 1
      %s111 = scalar_select %p108, %s109, %s110
      %p114 = pneg %p108
      %p115 = scmp.eq.s32.totalorder %s12, 3
      %p116 = por %p114, %p115
      %p117 = scmp.ne.s32.totalorder %s109, %s112
      %p118 = scmp.eq.s32.totalorder %s12, 0
      %p119 = por %p117, %p118
      %p120 = scmp.ne.s32.totalorder %s109, %s112
      %p121 = scmp.eq.s32.totalorder %s17, 3
      %p122 = por %p120, %p121
      %p123 = scmp.ne.s32.totalorder %s112, %s113
      %p124 = scmp.eq.s32.totalorder %s17, 0
      %p125 = por %p123, %p124
      %p126 = scmp.ne.s32.totalorder %s112, %s113
      %p127 = scmp.eq.s32.totalorder %s18, 3
      %p128 = por %p126, %p127
      %p130 = scmp.ne.s32.totalorder %s113, %s129
      %p131 = scmp.eq.s32.totalorder %s18, 0
      %p132 = por %p130, %p131
      %p133 = scmp.le.s32.totalorder 1, %s12
      %p134 = scmp.lt.s32.totalorder %s12, 5
      %p135 = pnand %p133, %p134
      %p136 = pneg %p135
      // Predicated region
      $region9: #{tpu_custom_call.1} parent=5 // pred_check
        _
      $region10: #{tpu_custom_call.1} parent=5 // pred_check_branch
        %138 = sbr.rel (%p135) target = $region12
      $region11: #{tpu_custom_call.1} parent=5 // pred_region
        %s139 = ssub.s32 %s12, 1
        // Predicated region
        $region13: #{tpu_custom_call.1} parent=11 // pred_check
          %p140 = pneg %p78
        $region14: #{tpu_custom_call.1} parent=11 // pred_check_branch
          %142 = sbr.rel (%p140) target = $region16
        $region15: #{tpu_custom_call.1} parent=11 // pred_region
          %s143 = smul.u32 4, %s22
          %p144 = scmp.lt.s32.totalorder %s143, 3
          %s145 = scalar_select %p144, %s143, 3
          %s146 = smul.addr %s145, 4
          %s147 = scalar_lea.vmem %s1, %s146
          %s148 = smul.u32 4, %s22
        $region16: #{tpu_custom_call.1} parent=11 // pred_fallthru
          _
        // Predicated region
        $region17: #{tpu_custom_call.1} parent=11 // pred_check
          %p149 = pneg %p99
        $region18: #{tpu_custom_call.1} parent=11 // pred_check_branch
          %151 = sbr.rel (%p149) target = $region20
        $region19: #{tpu_custom_call.1} parent=11 // pred_region
          _
        $region20: #{tpu_custom_call.1} parent=11 // pred_fallthru
          _
      $region12: #{tpu_custom_call.1} parent=5 // pred_fallthru
        _
      %p152 = scmp.lt.s32.totalorder %s12, 4
      // Predicated region
      $region21: #{tpu_custom_call.1} parent=5 // pred_check
        %p153 = pneg %p152
      $region22: #{tpu_custom_call.1} parent=5 // pred_check_branch
        %155 = sbr.rel (%p153) target = $region24
      $region23: #{tpu_custom_call.1} parent=5 // pred_region
        // Predicated region
        $region25: #{tpu_custom_call.1} parent=23 // pred_check
          %p156 = pneg %p46
        $region26: #{tpu_custom_call.1} parent=23 // pred_check_branch
          %158 = sbr.rel (%p156) target = $region28
        $region27: #{tpu_custom_call.1} parent=23 // pred_region
          %s159 = smul.u32 16, %s19
          %p160 = scmp.lt.s32.totalorder %s159, 63
          %s161 = scalar_select %p160, %s159, 63
          %p162 = scmp.lt.s32.totalorder %s20, 0
          %s163 = scalar_select %p162, %s20, 0
          %s164 = sadd.s32 %s163, %s161
          %s165 = smul.addr %s164, 4
          %s166 = scalar_lea.vmem %s0, %s165
          %s167 = smul.u32 16, %s19
        $region28: #{tpu_custom_call.1} parent=23 // pred_fallthru
          _
      $region24: #{tpu_custom_call.1} parent=5 // pred_fallthru
        _
      %p168 = scmp.le.s32.totalorder 1, %s12
      %p169 = scmp.lt.s32.totalorder %s12, 5
      %p170 = pnand %p168, %p169
      %p171 = pneg %p170
      // Predicated region
      $region29: #{tpu_custom_call.1} parent=5 // pred_check
        _
      $region30: #{tpu_custom_call.1} parent=5 // pred_check_branch
        %173 = sbr.rel (%p170) target = $region32
      $region31: #{tpu_custom_call.1} parent=5 // pred_region
        %s174 = ssub.s32 %s12, 1
        %s175 = smul.u32 16, %s21
        %p176 = scmp.lt.s32.totalorder %s175, 63
        %s177 = scalar_select %p176, %s175, 63
        %p178 = scmp.lt.s32.totalorder %s22, 0
        %s179 = scalar_select %p178, %s22, 0
        %s180 = sadd.s32 %s179, %s177
        %s181 = smul.addr %s180, 4
        %s182 = scalar_lea.vmem %s0, %s181
        %p183 = pneg %p52
        %p184 = pneg %p49
        %s185 = smul.u32 4, %s22
        %p186 = scmp.lt.s32.totalorder %s185, 3
        %s187 = scalar_select %p186, %s185, 3
        %s188 = smul.addr %s187, 4
        %s189 = scalar_lea.vmem %s1, %s188
        %p190 = pneg %p78
        %p191 = pneg %p75
        %p192 = pneg %p99
        %p193 = pneg %p96
        %p194 = pneg %p125
        %p195 = pneg %p122
        %s196 = sand.u32 %s112, 1
        %s197 = scalar_lea.sflag [#allocation4], %s196
        %s198 = sand.u32 %s112, 1
        %s199 = smul.addr %s198, 64
        %s200 = scalar_lea.vmem [#allocation3], %s199
        %s201 = smul.u32 16, %s21
        %p202 = scmp.lt.s32.totalorder %s201, 63
        %s203 = scalar_select %p202, %s201, 63
        %p204 = scmp.lt.s32.totalorder %s22, 0
        %s205 = scalar_select %p204, %s22, 0
        %s206 = sadd.s32 %s205, %s203
        %s207 = smul.addr %s206, 4
        %s208 = scalar_lea.vmem %s0, %s207
        %s209 = smul.u32 16, %s21
        %s210 = smul.u32 4, %s22
        %p211 = scmp.lt.s32.totalorder %s210, 3
        %s212 = scalar_select %p211, %s210, 3
        %s213 = smul.addr %s212, 4
        %s214 = scalar_lea.vmem %s1, %s213
        %s215 = smul.u32 4, %s22
        %s216 = smul.u32 16, %s21
        %p218 = scmp.eq.s32.totalorder %s22, 0
        // Predicated region
        $region33: #{tpu_custom_call.1} parent=31 // pred_check
          %p219 = pneg %p218
        $region34: #{tpu_custom_call.1} parent=31 // pred_check_branch
          %221 = sbr.rel (%p219) target = $region36
        $region35: #{tpu_custom_call.1} parent=31 // pred_region
          %222 = vst [vmem:[#allocation2] sm:$0xff] 0.0
          %223 = vst [vmem:[#allocation2 + $0x8] sm:$0xff] 0.0
          %224 = vst [vmem:[#allocation2 + $0x10] sm:$0xff] 0.0
          %225 = vst [vmem:[#allocation2 + $0x18] sm:$0xff] 0.0
          %226 = vst [vmem:[#allocation2 + $0x20] sm:$0xff] 0.0
          %227 = vst [vmem:[#allocation2 + $0x28] sm:$0xff] 0.0
          %228 = vst [vmem:[#allocation2 + $0x30] sm:$0xff] 0.0
          %229 = vst [vmem:[#allocation2 + $0x38] sm:$0xff] 0.0
          %230 = vst [vmem:[#allocation2 + $0x40] sm:$0xff] 0.0
          %231 = vst [vmem:[#allocation2 + $0x48] sm:$0xff] 0.0
          %232 = vst [vmem:[#allocation2 + $0x50] sm:$0xff] 0.0
          %233 = vst [vmem:[#allocation2 + $0x58] sm:$0xff] 0.0
          %234 = vst [vmem:[#allocation2 + $0x60] sm:$0xff] 0.0
          %235 = vst [vmem:[#allocation2 + $0x68] sm:$0xff] 0.0
          %236 = vst [vmem:[#allocation2 + $0x70] sm:$0xff] 0.0
          %237 = vst [vmem:[#allocation2 + $0x78] sm:$0xff] 0.0
        $region36: #{tpu_custom_call.1} parent=31 // pred_fallthru
          _
        %v238 = vld [vmem:[#allocation2] sm:$0xff]
        %v239 = vld [vmem:[#allocation2 + $0x8] sm:$0xff]
        %v240 = vld [vmem:[#allocation2 + $0x10] sm:$0xff]
        %v241 = vld [vmem:[#allocation2 + $0x18] sm:$0xff]
        %v242 = vld [vmem:[#allocation2 + $0x20] sm:$0xff]
        %v243 = vld [vmem:[#allocation2 + $0x28] sm:$0xff]
        %v244 = vld [vmem:[#allocation2 + $0x30] sm:$0xff]
        %v245 = vld [vmem:[#allocation2 + $0x38] sm:$0xff]
        %v246 = vld [vmem:[#allocation2 + $0x40] sm:$0xff]
        %v247 = vld [vmem:[#allocation2 + $0x48] sm:$0xff]
        %v248 = vld [vmem:[#allocation2 + $0x50] sm:$0xff]
        %v249 = vld [vmem:[#allocation2 + $0x58] sm:$0xff]
        %v250 = vld [vmem:[#allocation2 + $0x60] sm:$0xff]
        %v251 = vld [vmem:[#allocation2 + $0x68] sm:$0xff]
        %v252 = vld [vmem:[#allocation2 + $0x70] sm:$0xff]
        %v253 = vld [vmem:[#allocation2 + $0x78] sm:$0xff]
        %v254 = vld [vmem:[%s208] sm:$0xf]
        %v255 = vld [vmem:[%s208 + $0x4] sm:$0xf]
        %v256 = vld [vmem:[%s208 + $0x8] sm:$0xf]
        %v257 = vld [vmem:[%s208 + $0xc] sm:$0xf]
        %v258 = vld [vmem:[%s208 + $0x10] sm:$0xf]
        %v259 = vld [vmem:[%s208 + $0x14] sm:$0xf]
        %v260 = vld [vmem:[%s208 + $0x18] sm:$0xf]
        %v261 = vld [vmem:[%s208 + $0x1c] sm:$0xf]
        %v262 = vld [vmem:[%s208 + $0x20] sm:$0xf]
        %v263 = vld [vmem:[%s208 + $0x24] sm:$0xf]
        %v264 = vld [vmem:[%s208 + $0x28] sm:$0xf]
        %v265 = vld [vmem:[%s208 + $0x2c] sm:$0xf]
        %v266 = vld [vmem:[%s208 + $0x30] sm:$0xf]
        %v267 = vld [vmem:[%s208 + $0x34] sm:$0xf]
        %v268 = vld [vmem:[%s208 + $0x38] sm:$0xf]
        %v269 = vld [vmem:[%s208 + $0x3c] sm:$0xf]
        %v270 = vld [vmem:[%s214] sm:$0xf]
        %v271 = vld [vmem:[%s214 + $0x4] sm:$0xf]
        %v272 = vld [vmem:[%s214 + $0x8] sm:$0xf]
        %v273 = vld [vmem:[%s214 + $0xc] sm:$0x3]
        %v290 = vunpack.c.l.b16 %v254
        %v291 = vunpack.c.l.b16 %v255
        %v292 = vunpack.c.l.b16 %v256
        %v293 = vunpack.c.l.b16 %v257
        %v294 = vunpack.c.l.b16 %v258
        %v295 = vunpack.c.l.b16 %v259
        %v296 = vunpack.c.l.b16 %v260
        %v297 = vunpack.c.l.b16 %v261
        %v298 = vunpack.c.l.b16 %v262
        %v299 = vunpack.c.l.b16 %v263
        %v300 = vunpack.c.l.b16 %v264
        %v301 = vunpack.c.l.b16 %v265
        %v302 = vunpack.c.l.b16 %v266
        %v303 = vunpack.c.l.b16 %v267
        %v304 = vunpack.c.l.b16 %v268
        %v305 = vunpack.c.l.b16 %v269
        %v306 = vpack.c.b16 %v291, %v290
        %v307 = vpack.c.b16 %v293, %v292
        %v308 = vpack.c.b16 %v295, %v294
        %v309 = vpack.c.b16 %v297, %v296
        %v310 = vpack.c.b16 %v299, %v298
        %v311 = vpack.c.b16 %v301, %v300
        %v312 = vpack.c.b16 %v303, %v302
        %v313 = vpack.c.b16 %v305, %v304
        %v318 = vunpack.c.l.b16 %v270
        %v319 = vunpack.c.l.b16 %v271
        %v320 = vunpack.c.l.b16 %v272
        %v321 = vunpack.c.l.b16 %v273
        %v322 = vpack.c.b16 %v319, %v318
        %v323 = vpack.c.b16 %v321, %v320
        %vm325 = vcmask 220160
        %v327 = vsel %vm325, %v306, 0
        %v330 = vsel %vm325, %v307, 0
        %v333 = vsel %vm325, %v308, 0
        %v336 = vsel %vm325, %v309, 0
        %v339 = vsel %vm325, %v310, 0
        %v342 = vsel %vm325, %v311, 0
        %v345 = vsel %vm325, %v312, 0
        %v348 = vsel %vm325, %v313, 0
        %vm350 = vcmask 1044480
        %vm351 = vcmask 1045504
        %v352 = vsel %vm350, 4294967295, 65535
        %v353 = vsel %vm351, %v352, 0
        %v355 = vand.u32 %v323, %v353
        %357 = vmatprep.subr.bf16.mxu0 0
        %358 = vmatpush1.bf16.msra.mxu0 %v322
        %359 = vmatprep.subr.bf16.mxu0 0
        %360 = vmatpush1.bf16.msra.mxu0 %v355
        %361 = vmatprep.subr.bf16.mxu0 0
        %362 = vmatpush1.bf16.msra.mxu0 0
        %363 = vmatprep.subr.bf16.mxu0 0
        %364 = vmatpush1.bf16.msra.mxu0 0
        %365 = vmatprep.subr.bf16.mxu0 0
        %366 = vmatpush1.bf16.msra.mxu0 0
        %367 = vmatprep.subr.bf16.mxu0 0
        %368 = vmatpush1.bf16.msra.mxu0 0
        %369 = vmatprep.subr.bf16.mxu0 0
        %370 = vmatpush1.bf16.msra.mxu0 0
        %371 = vmatprep.subr.bf16.mxu0 0
        %372 = vmatpush1.bf16.msra.mxu0 0
        %373 = vmatprep.subr.bf16.mxu0 0
        %374 = vmatpush1.bf16.msra.mxu0 0
        %375 = vmatprep.subr.bf16.mxu0 0
        %376 = vmatpush1.bf16.msra.mxu0 0
        %377 = vmatprep.subr.bf16.mxu0 0
        %378 = vmatpush1.bf16.msra.mxu0 0
        %379 = vmatprep.subr.bf16.mxu0 0
        %380 = vmatpush1.bf16.msra.mxu0 0
        %381 = vmatprep.subr.bf16.mxu0 0
        %382 = vmatpush1.bf16.msra.mxu0 0
        %383 = vmatprep.subr.bf16.mxu0 0
        %384 = vmatpush1.bf16.msra.mxu0 0
        %385 = vmatprep.subr.bf16.mxu0 0
        %386 = vmatpush1.bf16.msra.mxu0 0
        %387 = vmatprep.subr.bf16.mxu0 0
        %388 = vmatpush1.bf16.msra.mxu0 0
        %389 = vmatprep.mubr.bf16.mxu0 0
        %390 = vmatmul.mubr.bf16.gmra.mrb[0].mxu0 %v327
        %v391 = vpop.f32.mrb[0].mxu0
        %v392 = vadd.f32 0.0, %v391
        %v393 = vpop.f32.mrb[0].mxu0
        %v394 = vpop.f32.mrb[0].mxu0
        %v395 = vadd.f32 0.0, %v394
        %v396 = vpop.f32.mrb[0].mxu0
        %397 = vmatprep.mubr.bf16.mxu0 0
        %398 = vmatmul.mubr.bf16.gmra.mrb[0].mxu0 %v330
        %v399 = vpop.f32.mrb[0].mxu0
        %v400 = vadd.f32 0.0, %v399
        %v401 = vpop.f32.mrb[0].mxu0
        %v402 = vpop.f32.mrb[0].mxu0
        %v403 = vadd.f32 0.0, %v402
        %v404 = vpop.f32.mrb[0].mxu0
        %405 = vmatprep.mubr.bf16.mxu0 0
        %406 = vmatmul.mubr.bf16.gmra.mrb[0].mxu0 %v333
        %v407 = vpop.f32.mrb[0].mxu0
        %v408 = vadd.f32 0.0, %v407
        %v409 = vpop.f32.mrb[0].mxu0
        %v410 = vpop.f32.mrb[0].mxu0
        %v411 = vadd.f32 0.0, %v410
        %v412 = vpop.f32.mrb[0].mxu0
        %413 = vmatprep.mubr.bf16.mxu0 0
        %414 = vmatmul.mubr.bf16.gmra.mrb[0].mxu0 %v336
        %v415 = vpop.f32.mrb[0].mxu0
        %v416 = vadd.f32 0.0, %v415
        %v417 = vpop.f32.mrb[0].mxu0
        %v418 = vpop.f32.mrb[0].mxu0
        %v419 = vadd.f32 0.0, %v418
        %v420 = vpop.f32.mrb[0].mxu0
        %421 = vmatprep.mubr.bf16.mxu0 0
        %422 = vmatmul.mubr.bf16.gmra.mrb[0].mxu0 %v339
        %v423 = vpop.f32.mrb[0].mxu0
        %v424 = vadd.f32 0.0, %v423
        %v425 = vpop.f32.mrb[0].mxu0
        %v426 = vpop.f32.mrb[0].mxu0
        %v427 = vadd.f32 0.0, %v426
        %v428 = vpop.f32.mrb[0].mxu0
        %429 = vmatprep.mubr.bf16.mxu0 0
        %430 = vmatmul.mubr.bf16.gmra.mrb[0].mxu0 %v342
        %v431 = vpop.f32.mrb[0].mxu0
        %v432 = vadd.f32 0.0, %v431
        %v433 = vpop.f32.mrb[0].mxu0
        %v434 = vpop.f32.mrb[0].mxu0
        %v435 = vadd.f32 0.0, %v434
        %v436 = vpop.f32.mrb[0].mxu0
        %437 = vmatprep.mubr.bf16.mxu0 0
        %438 = vmatmul.mubr.bf16.gmra.mrb[0].mxu0 %v345
        %v439 = vpop.f32.mrb[0].mxu0
        %v440 = vadd.f32 0.0, %v439
        %v441 = vpop.f32.mrb[0].mxu0
        %v442 = vpop.f32.mrb[0].mxu0
        %v443 = vadd.f32 0.0, %v442
        %v444 = vpop.f32.mrb[0].mxu0
        %445 = vmatprep.mubr.bf16.mxu0 0
        %446 = vmatmul.mubr.bf16.gmra.mrb[0].mxu0 %v348
        %v447 = vpop.f32.mrb[0].mxu0
        %v448 = vadd.f32 0.0, %v447
        %v449 = vpop.f32.mrb[0].mxu0
        %v450 = vpop.f32.mrb[0].mxu0
        %v451 = vadd.f32 0.0, %v450
        %v452 = vpop.f32.mrb[0].mxu0
        %453 = vdwg.mxu0
        %v454 = vadd.f32 %v238, %v392
        %v455 = vadd.f32 %v239, %v395
        %v456 = vadd.f32 %v240, %v400
        %v457 = vadd.f32 %v241, %v403
        %v458 = vadd.f32 %v242, %v408
        %v459 = vadd.f32 %v243, %v411
        %v460 = vadd.f32 %v244, %v416
        %v461 = vadd.f32 %v245, %v419
        %v462 = vadd.f32 %v246, %v424
        %v463 = vadd.f32 %v247, %v427
        %v464 = vadd.f32 %v248, %v432
        %v465 = vadd.f32 %v249, %v435
        %v466 = vadd.f32 %v250, %v440
        %v467 = vadd.f32 %v251, %v443
        %v468 = vadd.f32 %v252, %v448
        %v469 = vadd.f32 %v253, %v451
        %470 = vst [vmem:[#allocation2] sm:$0xff] %v454
        %471 = vst [vmem:[#allocation2 + $0x8] sm:$0xff] %v455
        %472 = vst [vmem:[#allocation2 + $0x10] sm:$0xff] %v456
        %473 = vst [vmem:[#allocation2 + $0x18] sm:$0xff] %v457
        %474 = vst [vmem:[#allocation2 + $0x20] sm:$0xff] %v458
        %475 = vst [vmem:[#allocation2 + $0x28] sm:$0xff] %v459
        %476 = vst [vmem:[#allocation2 + $0x30] sm:$0xff] %v460
        %477 = vst [vmem:[#allocation2 + $0x38] sm:$0xff] %v461
        %478 = vst [vmem:[#allocation2 + $0x40] sm:$0xff] %v462
        %479 = vst [vmem:[#allocation2 + $0x48] sm:$0xff] %v463
        %480 = vst [vmem:[#allocation2 + $0x50] sm:$0xff] %v464
        %481 = vst [vmem:[#allocation2 + $0x58] sm:$0xff] %v465
        %482 = vst [vmem:[#allocation2 + $0x60] sm:$0xff] %v466
        %483 = vst [vmem:[#allocation2 + $0x68] sm:$0xff] %v467
        %484 = vst [vmem:[#allocation2 + $0x70] sm:$0xff] %v468
        %485 = vst [vmem:[#allocation2 + $0x78] sm:$0xff] %v469
        // Predicated region
        $region37: #{tpu_custom_call.1} parent=31 // pred_check
          %p486 = pneg %p218
        $region38: #{tpu_custom_call.1} parent=31 // pred_check_branch
          %488 = sbr.rel (%p486) target = $region40
        $region39: #{tpu_custom_call.1} parent=31 // pred_region
          %v489 = vld [vmem:[#allocation2] sm:$0xff]
          %v490 = vld [vmem:[#allocation2 + $0x8] sm:$0xff]
          %v491 = vld [vmem:[#allocation2 + $0x10] sm:$0xff]
          %v492 = vld [vmem:[#allocation2 + $0x18] sm:$0xff]
          %v493 = vld [vmem:[#allocation2 + $0x20] sm:$0xff]
          %v494 = vld [vmem:[#allocation2 + $0x28] sm:$0xff]
          %v495 = vld [vmem:[#allocation2 + $0x30] sm:$0xff]
          %v496 = vld [vmem:[#allocation2 + $0x38] sm:$0xff]
          %v497 = vld [vmem:[#allocation2 + $0x40] sm:$0xff]
          %v498 = vld [vmem:[#allocation2 + $0x48] sm:$0xff]
          %v499 = vld [vmem:[#allocation2 + $0x50] sm:$0xff]
          %v500 = vld [vmem:[#allocation2 + $0x58] sm:$0xff]
          %v501 = vld [vmem:[#allocation2 + $0x60] sm:$0xff]
          %v502 = vld [vmem:[#allocation2 + $0x68] sm:$0xff]
          %v503 = vld [vmem:[#allocation2 + $0x70] sm:$0xff]
          %v504 = vld [vmem:[#allocation2 + $0x78] sm:$0xff]
          %v505 = vld [vmem:[%s2] sm:$0x1]
          %v507 = vlaneseq
          %v508 = vshrl.u32 %v507, 7
          %v509 = vsub.s32 0, %v508
          %v510 = vrot.slane %v505, %v509
          %v512 = vadd.f32 %v489, %v510
          %v513 = vadd.f32 %v490, %v510
          %v514 = vadd.f32 %v491, %v510
          %v515 = vadd.f32 %v492, %v510
          %v516 = vadd.f32 %v493, %v510
          %v517 = vadd.f32 %v494, %v510
          %v518 = vadd.f32 %v495, %v510
          %v519 = vadd.f32 %v496, %v510
          %v520 = vadd.f32 %v497, %v510
          %v521 = vadd.f32 %v498, %v510
          %v522 = vadd.f32 %v499, %v510
          %v523 = vadd.f32 %v500, %v510
          %v524 = vadd.f32 %v501, %v510
          %v525 = vadd.f32 %v502, %v510
          %v526 = vadd.f32 %v503, %v510
          %v527 = vadd.f32 %v504, %v510
          %vm528 = vcmp.ge.f32.partialorder %v512, 0.0
          %vm529 = vcmp.ge.f32.partialorder %v513, 0.0
          %vm530 = vcmp.ge.f32.partialorder %v514, 0.0
          %vm531 = vcmp.ge.f32.partialorder %v515, 0.0
          %vm532 = vcmp.ge.f32.partialorder %v516, 0.0
          %vm533 = vcmp.ge.f32.partialorder %v517, 0.0
          %vm534 = vcmp.ge.f32.partialorder %v518, 0.0
          %vm535 = vcmp.ge.f32.partialorder %v519, 0.0
          %vm536 = vcmp.ge.f32.partialorder %v520, 0.0
          %vm537 = vcmp.ge.f32.partialorder %v521, 0.0
          %vm538 = vcmp.ge.f32.partialorder %v522, 0.0
          %vm539 = vcmp.ge.f32.partialorder %v523, 0.0
          %vm540 = vcmp.ge.f32.partialorder %v524, 0.0
          %vm541 = vcmp.ge.f32.partialorder %v525, 0.0
          %vm542 = vcmp.ge.f32.partialorder %v526, 0.0
          %vm543 = vcmp.ge.f32.partialorder %v527, 0.0
          %v544 = vmul.f32 %v512, 0.2
          %v545 = vmul.f32 %v513, 0.2
          %v546 = vmul.f32 %v514, 0.2
          %v547 = vmul.f32 %v515, 0.2
          %v548 = vmul.f32 %v516, 0.2
          %v549 = vmul.f32 %v517, 0.2
          %v550 = vmul.f32 %v518, 0.2
          %v551 = vmul.f32 %v519, 0.2
          %v552 = vmul.f32 %v520, 0.2
          %v553 = vmul.f32 %v521, 0.2
          %v554 = vmul.f32 %v522, 0.2
          %v555 = vmul.f32 %v523, 0.2
          %v556 = vmul.f32 %v524, 0.2
          %v557 = vmul.f32 %v525, 0.2
          %v558 = vmul.f32 %v526, 0.2
          %v559 = vmul.f32 %v527, 0.2
          %v560 = vsel %vm528, %v512, %v544
          %v561 = vsel %vm529, %v513, %v545
          %v562 = vsel %vm530, %v514, %v546
          %v563 = vsel %vm531, %v515, %v547
          %v564 = vsel %vm532, %v516, %v548
          %v565 = vsel %vm533, %v517, %v549
          %v566 = vsel %vm534, %v518, %v550
          %v567 = vsel %vm535, %v519, %v551
          %v568 = vsel %vm536, %v520, %v552
          %v569 = vsel %vm537, %v521, %v553
          %v570 = vsel %vm538, %v522, %v554
          %v571 = vsel %vm539, %v523, %v555
          %v572 = vsel %vm540, %v524, %v556
          %v573 = vsel %vm541, %v525, %v557
          %v574 = vsel %vm542, %v526, %v558
          %v575 = vsel %vm543, %v527, %v559
          %v576 = vpack.c.bf16 %v561, %v560
          %v577 = vpack.c.bf16 %v563, %v562
          %v578 = vpack.c.bf16 %v565, %v564
          %v579 = vpack.c.bf16 %v567, %v566
          %v580 = vpack.c.bf16 %v569, %v568
          %v581 = vpack.c.bf16 %v571, %v570
          %v582 = vpack.c.bf16 %v573, %v572
          %v583 = vpack.c.bf16 %v575, %v574
          %v592 = vunpack.c.l.b16 %v576
          %v593 = vunpack.c.h.b16 %v576
          %v594 = vunpack.c.l.b16 %v577
          %v595 = vunpack.c.h.b16 %v577
          %v596 = vunpack.c.l.b16 %v578
          %v597 = vunpack.c.h.b16 %v578
          %v598 = vunpack.c.l.b16 %v579
          %v599 = vunpack.c.h.b16 %v579
          %v600 = vunpack.c.l.b16 %v580
          %v601 = vunpack.c.h.b16 %v580
          %v602 = vunpack.c.l.b16 %v581
          %v603 = vunpack.c.h.b16 %v581
          %v604 = vunpack.c.l.b16 %v582
          %v605 = vunpack.c.h.b16 %v582
          %v606 = vunpack.c.l.b16 %v583
          %v607 = vunpack.c.h.b16 %v583
          %v608 = vpack.c.b16 %v592, %v592
          %v609 = vpack.c.b16 %v593, %v593
          %v610 = vpack.c.b16 %v594, %v594
          %v611 = vpack.c.b16 %v595, %v595
          %v612 = vpack.c.b16 %v596, %v596
          %v613 = vpack.c.b16 %v597, %v597
          %v614 = vpack.c.b16 %v598, %v598
          %v615 = vpack.c.b16 %v599, %v599
          %v616 = vpack.c.b16 %v600, %v600
          %v617 = vpack.c.b16 %v601, %v601
          %v618 = vpack.c.b16 %v602, %v602
          %v619 = vpack.c.b16 %v603, %v603
          %v620 = vpack.c.b16 %v604, %v604
          %v621 = vpack.c.b16 %v605, %v605
          %v622 = vpack.c.b16 %v606, %v606
          %v623 = vpack.c.b16 %v607, %v607
          %640 = vst [vmem:[%s200] sm:$0xf] %v608
          %641 = vst [vmem:[%s200 + $0x4] sm:$0xf] %v609
          %642 = vst [vmem:[%s200 + $0x8] sm:$0xf] %v610
          %643 = vst [vmem:[%s200 + $0xc] sm:$0xf] %v611
          %644 = vst [vmem:[%s200 + $0x10] sm:$0xf] %v612
          %645 = vst [vmem:[%s200 + $0x14] sm:$0xf] %v613
          %646 = vst [vmem:[%s200 + $0x18] sm:$0xf] %v614
          %647 = vst [vmem:[%s200 + $0x1c] sm:$0xf] %v615
          %648 = vst [vmem:[%s200 + $0x20] sm:$0xf] %v616
          %649 = vst [vmem:[%s200 + $0x24] sm:$0xf] %v617
          %650 = vst [vmem:[%s200 + $0x28] sm:$0xf] %v618
          %651 = vst [vmem:[%s200 + $0x2c] sm:$0xf] %v619
          %652 = vst [vmem:[%s200 + $0x30] sm:$0xf] %v620
          %653 = vst [vmem:[%s200 + $0x34] sm:$0xf] %v621
          %654 = vst [vmem:[%s200 + $0x38] sm:$0xf] %v622
          %655 = vst [vmem:[%s200 + $0x3c] sm:$0xf] %v623
        $region40: #{tpu_custom_call.1} parent=31 // pred_fallthru
          _
        %s656 = sand.u32 %s112, 1
        %s657 = scalar_lea.sflag [#allocation4], %s656
        %s658 = sand.u32 %s112, 1
        %s659 = smul.addr %s658, 64
        %s660 = scalar_lea.vmem [#allocation3], %s659
        // Predicated region
        $region41: #{tpu_custom_call.1} parent=31 // pred_check
          %p661 = pneg %p122
        $region42: #{tpu_custom_call.1} parent=31 // pred_check_branch
          %663 = sbr.rel (%p661) target = $region44
        $region43: #{tpu_custom_call.1} parent=31 // pred_region
          %s664 = smul.u32 16, %s21
          %s666 = ssub.s32 1024, 1024
          %667 = vsyncadd %s657, %s666
          %s668 = smul.addr %s664, 64
          %s669 = scalar_lea.hbm %s3, %s668
          %s670 = sshll.u32 %s660, 4
          %s671 = int_to_ptr.vmem [resolvable:$true] %s670
          %676 = dma.vmem_to_hbm [thread:$0]  %s671, 1024, %s669, %s657, 64, 64, 4
        $region44: #{tpu_custom_call.1} parent=31 // pred_fallthru
          _
      $region32: #{tpu_custom_call.1} parent=5 // pred_fallthru
        _
      %p677 = scmp.le.s32.totalorder 2, %s12
      // Predicated region
      $region45: #{tpu_custom_call.1} parent=5 // pred_check
        %p678 = pneg %p677
      $region46: #{tpu_custom_call.1} parent=5 // pred_check_branch
        %680 = sbr.rel (%p678) target = $region48
      $region47: #{tpu_custom_call.1} parent=5 // pred_region
        %s681 = ssub.s32 %s12, 2
        // Predicated region
        $region49: #{tpu_custom_call.1} parent=47 // pred_check
          %p682 = pneg %p128
        $region50: #{tpu_custom_call.1} parent=47 // pred_check_branch
          %684 = sbr.rel (%p682) target = $region52
        $region51: #{tpu_custom_call.1} parent=47 // pred_region
          %s685 = sand.u32 %s113, 1
          %s686 = scalar_lea.sflag [#allocation4], %s685
          %s687 = sand.u32 %s113, 1
          %s688 = smul.addr %s687, 64
          %s689 = scalar_lea.vmem [#allocation3], %s688
          %690 = dma.done %s686, 1024
        $region52: #{tpu_custom_call.1} parent=47 // pred_fallthru
          _
      $region48: #{tpu_custom_call.1} parent=5 // pred_fallthru
        _
    $region6: #{tpu_custom_call.1} parent=1 // loop_footer
      %s16 = sadd.s32 1, %s12
    $region7: #{tpu_custom_call.1} parent=1 // loop_footer_branch
      %11 = sbr.rel target = $region3
    $region8: #{tpu_custom_call.1} parent=1 // loop_exit
      _
    %691 = vsyncpa [#allocation4], 1
    %s692 = scalar_lea.sflag [#allocation4], 1
    %693 = vsyncpa %s692, 1

</llo_original>
